<compile_context>
chip_gen: v7x
topology: tpu7x:2x2x1
jax: 0.10.0
libtpu: 0.0.40
codegen_flags: <defaults>
</compile_context>

<pallas_src>
import functools

import jax
import jax.numpy as jnp
from jax.experimental import pallas as pl
from jax.experimental.pallas import tpu as pltpu


def _quant_leakyrelu_kernel(x_ref, o_ref, *, neg_slope, scale, qmin, qmax,
                            quant_output):
    x = x_ref[...].astype(jnp.float32)
    # LeakyReLU with (possibly quantized) negative slope.
    y = jnp.where(x >= 0, x, x * neg_slope)
    if quant_output:
        # QuantizeFeature: fixed-point round + saturate, then de-scale.
        q = jnp.clip(jnp.round(y * scale), qmin, qmax)
        y = q * (1.0 / scale)
    o_ref[...] = y.astype(o_ref.dtype)


def quantized_leakyrelu(x, *, negative_slope=0.1, feature_frac=4,
                        bitwidth=8, quant_output=True, quant_weight=True,
                        out_dtype=None):
    """Pallas implementation of QuantizedLeakyrelu.forward (elementwise)."""
    assert bitwidth in (8, 16)
    if quant_weight:
        neg_slope = min(127, max(-128, round(negative_slope * 64))) / 64.0
    else:
        neg_slope = float(negative_slope)

    scale = float(2.0 ** int(feature_frac))
    qmin = float(-(2 ** (bitwidth - 1)))
    qmax = float(2 ** (bitwidth - 1) - 1)

    orig_shape = x.shape
    in_dtype = x.dtype
    if out_dtype is None:
        out_dtype = in_dtype  # keep PyTorch semantics (same dtype out)
    total = int(x.size)
    if total == 0:
        return jnp.reshape(x.astype(out_dtype), orig_shape)

    # Adaptive lane width: largest power-of-two multiple of 128 dividing total.
    lane = None
    for cand in (1024, 512, 256, 128):
        if total % cand == 0:
            lane = cand
            break
    ragged = lane is None
    if ragged:
        # Fallback for ragged totals: lane=128 keeps stores lane-dense while
        # minimising the (single, < 512-byte) pad.
        lane = 128
        rows = pl.cdiv(total, lane)
    else:
        rows = total // lane

    in_itemsize = jnp.dtype(in_dtype).itemsize
    out_itemsize = jnp.dtype(out_dtype).itemsize
    # Dtype-aware sublane granularity: 8 rows f32, 16 bf16, 32 int8/fp8.
    sublane = max(8, 32 // in_itemsize)

    # Device-aware block byte budget (in+out double-buffered = 4x this):
    #   v5-class: 2 MiB (fits 16 MiB scoped VMEM default)
    #   v6e/v7x : 4 MiB (fits 32 MiB scoped VMEM default)
    try:
        kind = jax.devices()[0].device_kind.lower()
    except Exception:  # pragma: no cover - defensive
        kind = ""
    block_bytes = (2 << 20) if "v5" in kind else (4 << 20)

    block_rows_cap = max(sublane,
                         (block_bytes // (lane * in_itemsize)) // sublane * sublane)
    if rows <= block_rows_cap:
        # Single block spanning the whole (rows, lane) array: block_shape equals
        # the full array dims, so no (8,128) divisibility requirement applies.
        block_rows = rows
    else:
        # Multiple blocks; block_rows is a multiple of `sublane` (>= 8).  The
        # final partial block (if any) is read-padded and write-masked by
        # Pallas -- no wrapper-side padding needed.
        block_rows = block_rows_cap
    grid = (pl.cdiv(rows, block_rows),)

    xf = jnp.reshape(x, (-1,))
    padded_total = rows * lane
    if ragged:
        # Zero-pad is numerically safe (f(0) == 0) and is sliced off below.
        xf = jnp.pad(xf, (0, padded_total - total))
    x2 = jnp.reshape(xf, (rows, lane))

    kernel = functools.partial(
        _quant_leakyrelu_kernel,
        neg_slope=neg_slope, scale=scale, qmin=qmin, qmax=qmax,
        quant_output=quant_output)

    cost = pl.CostEstimate(
        flops=5 * total,
        transcendentals=0,
        bytes_accessed=total * (in_itemsize + out_itemsize))

    out2 = pl.pallas_call(
        kernel,
        out_shape=jax.ShapeDtypeStruct((rows, lane), out_dtype),
        grid_spec=pltpu.PrefetchScalarGridSpec(
            num_scalar_prefetch=0,
            grid=grid,
            in_specs=[pl.BlockSpec((block_rows, lane), lambda i: (i, 0))],
            out_specs=pl.BlockSpec((block_rows, lane), lambda i: (i, 0)),
        ),
        compiler_params=pltpu.CompilerParams(
            dimension_semantics=("parallel",)),
        cost_estimate=cost,
    )(x2)

    out = jnp.reshape(out2, (-1,))
    if ragged:
        out = out[:total]
    return jnp.reshape(out, orig_shape)


def _reference(x, negative_slope, feature_frac, bitwidth, quant_output,
               quant_weight):
    if quant_weight:
        slope = min(127, max(-128, round(negative_slope * 64))) / 64.0
    else:
        slope = negative_slope
    y = jnp.where(x >= 0, x, x * slope)
    if quant_output:
        scale = 2.0 ** int(feature_frac)
        qmin = -(2 ** (bitwidth - 1))
        qmax = 2 ** (bitwidth - 1) - 1
        y = jnp.clip(jnp.round(y * scale), qmin, qmax) / scale
    return y.astype(x.dtype)


if __name__ == "__main__":
    key = jax.random.PRNGKey(0)
    negative_slope = 0.1   # layer.negative_slope
    feature_frac = 4       # param_dict[layer.top + '_frac']
    bitwidth = 8

    # Primary example: NCHW activation from the preceding conv layer.
    shapes = [
        (2, 4, 16, 16),    # total 2048 -> lane=1024, single block, zero copies
        (1, 2, 16, 8),     # total 256  -> lane=256 adaptive path
        (2, 3, 17, 19),    # total 1938 -> ragged fallback (lane=128 + tiny pad)
    ]
    for shape in shapes:
        key, sub = jax.random.split(key)
        x = jax.random.normal(sub, shape, dtype=jnp.float32) * 4.0

        out = quantized_leakyrelu(
            x,
            negative_slope=negative_slope,
            feature_frac=feature_frac,
            bitwidth=bitwidth,
            quant_output=True,
            quant_weight=True,
        )
        out = jax.block_until_ready(out)

        ref = _reference(x, negative_slope, feature_frac, bitwidth, True, True)
        assert out.shape == x.shape and out.dtype == x.dtype
        assert jnp.allclose(out, ref, atol=1e-6), f"mismatch vs reference {shape}"

    print("KERNEL_OK")
</pallas_src>

<mosaic_0001>
module attributes {stable_mosaic.version = 11 : i64} {
  func.func @_quant_leakyrelu_kernel(%arg0: i32, %arg1: memref<2x1024xf32, #tpu.memory_space<vmem>>, %arg2: memref<2x1024xf32, #tpu.memory_space<vmem>>) attributes {dimension_semantics = [#tpu.dimension_semantics<parallel>], iteration_bounds = array<i64: 1>, scalar_prefetch = 0 : i64, scratch_operands = 0 : i64, tpu.core_type = #tpu.core_type<tc>, window_params = [{transform_indices = @transform_0, window_bounds = array<i64: 2, 1024>}, {transform_indices = @transform_1, window_bounds = array<i64: 2, 1024>}]} {
    %c0 = arith.constant 0 : index
    %c0_0 = arith.constant 0 : index
    %0 = vector.load %arg1[%c0, %c0_0] : memref<2x1024xf32, #tpu.memory_space<vmem>>, vector<2x1024xf32>
    %cst = arith.constant 0.000000e+00 : f32
    %1 = vector.broadcast %cst : f32 to vector<2x1024xf32>
    %2 = arith.cmpf oge, %0, %1 : vector<2x1024xf32>
    %cst_1 = arith.constant 9.375000e-02 : f32
    %3 = vector.broadcast %cst_1 : f32 to vector<2x1024xf32>
    %4 = arith.mulf %0, %3 : vector<2x1024xf32>
    %5 = arith.select %2, %0, %4 : vector<2x1024xi1>, vector<2x1024xf32>
    %cst_2 = arith.constant 1.600000e+01 : f32
    %6 = vector.broadcast %cst_2 : f32 to vector<2x1024xf32>
    %7 = arith.mulf %5, %6 : vector<2x1024xf32>
    %8 = math.roundeven %7 : vector<2x1024xf32>
    %cst_3 = arith.constant -1.280000e+02 : f32
    %cst_4 = arith.constant 1.270000e+02 : f32
    %9 = vector.broadcast %cst_3 : f32 to vector<2x1024xf32>
    %10 = arith.maximumf %9, %8 : vector<2x1024xf32>
    %11 = vector.broadcast %cst_4 : f32 to vector<2x1024xf32>
    %12 = arith.minimumf %11, %10 : vector<2x1024xf32>
    %cst_5 = arith.constant 6.250000e-02 : f32
    %13 = vector.broadcast %cst_5 : f32 to vector<2x1024xf32>
    %14 = arith.mulf %12, %13 : vector<2x1024xf32>
    %c0_6 = arith.constant 0 : index
    %c0_7 = arith.constant 0 : index
    %15 = vector.load %arg2[%c0_6, %c0_7] : memref<2x1024xf32, #tpu.memory_space<vmem>>, vector<2x1024xf32>
    tpu.vector_store %arg2[%c0_6, %c0_7], %14 {strides = array<i32>} : memref<2x1024xf32, #tpu.memory_space<vmem>>, vector<2x1024xf32>,
    return
  }
  func.func @transform_0(%arg0: i32) -> (i32, i32) {
    %c0_i32 = arith.constant 0 : i32
    %c0_i32_0 = arith.constant 0 : i32
    return %arg0, %c0_i32 : i32, i32
  }
  func.func @transform_1(%arg0: i32) -> (i32, i32) {
    %c0_i32 = arith.constant 0 : i32
    %c0_i32_0 = arith.constant 0 : i32
    return %arg0, %c0_i32 : i32, i32
  }
}

</mosaic_0001>

<llo_original>
// kernel: tpu_custom_call.1
$region0: #{tpu_custom_call.1}
  #allocation0 [shape = 'u32[]', space=smem, size = 0x4, offset = 0x4, fixed_abs, tag = 'smem constant byte address 0x4 - core index']
  #allocation1 [shape = 'u32[144,128]{1,0:T(1,128)}', space=vmem, size = 0x12000, scoped, tag = 'internal scratch']
  %s0 = inlined_call_operand.hbm [shape: f32[2,1024], index: 0, kind: input, shape index: {}]
  %s1 = inlined_call_operand.hbm [shape: f32[2,1024], index: 1, kind: output, shape index: {}]
  %s2 = sld [smem:[#allocation0]]
  $region18: #{tpu_custom_call.1} parent=0
    _
  %s4 = ssub.s32 1, %s2
  %s5 = scalar_select 0, %s4, %s2
  $region1: #{tpu_custom_call.1} parent=0
    #allocation2 [shape = 'u8[8192]{0}', space=vmem, size = 0x2000, scoped, tag = 'input window, operand 0, single buffered']
    #allocation3 [shape = 's32[1]{0}', space=sflag, size = 0x4, scoped, tag = 'scoped memory for tpu_custom_call.1']
    #allocation4 [shape = 's32[1]{0}', space=sflag, size = 0x4, scoped, tag = 'scoped memory for tpu_custom_call.1']
    #allocation5 [shape = 'u8[8192]{0}', space=vmem, size = 0x2000, scoped, tag = 'output window, operand 0, single buffered']
    %6 = vsyncpa [#allocation3], 0
    %7 = vsyncpa [#allocation4], 0
    // Predicated region
    $region2: #{tpu_custom_call.1} parent=1 // pred_check
      _
    $region3: #{tpu_custom_call.1} parent=1 // pred_check_branch
      %9 = sbr.rel (0) target = $region5
    $region4: #{tpu_custom_call.1} parent=1 // pred_region
      %s11 = ssub.s32 256, 256
      %12 = vsyncadd [#allocation3], %s11
      %s14 = sshll.u32 [#allocation2], 4
      %s15 = int_to_ptr.vmem [resolvable:$true] %s14
      %17 = dma.hbm_to_vmem [thread:$0]  %s0, 256, %s15, [#allocation3]
    $region5: #{tpu_custom_call.1} parent=1 // pred_fallthru
      _
    // Predicated region
    $region6: #{tpu_custom_call.1} parent=1 // pred_check
      _
    $region7: #{tpu_custom_call.1} parent=1 // pred_check_branch
      %19 = sbr.rel (0) target = $region9
    $region8: #{tpu_custom_call.1} parent=1 // pred_region
      %20 = dma.done [#allocation3], 256
    $region9: #{tpu_custom_call.1} parent=1 // pred_fallthru
      _
    %v21 = vld [vmem:[#allocation2] sm:$0xff]
    %v22 = vld [vmem:[#allocation2 + $0x8] sm:$0xff]
    %vm23 = vcmp.ge.f32.partialorder %v21, 0.0
    %vm24 = vcmp.ge.f32.partialorder %v22, 0.0
    %v25 = vmul.f32 %v21, 0.09375
    %v26 = vmul.f32 %v22, 0.09375
    %v27 = vsel %vm23, %v21, %v25
    %v28 = vsel %vm24, %v22, %v26
    %v29 = vmul.f32 %v27, 16.0
    %v30 = vmul.f32 %v28, 16.0
    %v31 = vround.ne.pseudo %v29
    %v32 = vround.ne.pseudo %v30
    %v33 = vmax.f32 %v31, -128.0
    %v34 = vmax.f32 %v32, -128.0
    %v35 = vmin.f32 %v33, 127.0
    %v36 = vmin.f32 %v34, 127.0
    %v37 = vmul.f32 %v35, 0.0625
    %v38 = vmul.f32 %v36, 0.0625
    %39 = vst [vmem:[#allocation5] sm:$0xff] %v37
    %40 = vst [vmem:[#allocation5 + $0x8] sm:$0xff] %v38
    // Predicated region
    $region10: #{tpu_custom_call.1} parent=1 // pred_check
      _
    $region11: #{tpu_custom_call.1} parent=1 // pred_check_branch
      %42 = sbr.rel (0) target = $region13
    $region12: #{tpu_custom_call.1} parent=1 // pred_region
      %s44 = ssub.s32 256, 256
      %45 = vsyncadd [#allocation4], %s44
      %s47 = sshll.u32 [#allocation5], 4
      %s48 = int_to_ptr.vmem [resolvable:$true] %s47
      %50 = dma.vmem_to_hbm [thread:$0]  %s48, 256, %s1, [#allocation4]
    $region13: #{tpu_custom_call.1} parent=1 // pred_fallthru
      _
    // Predicated region
    $region14: #{tpu_custom_call.1} parent=1 // pred_check
      _
    $region15: #{tpu_custom_call.1} parent=1 // pred_check_branch
      %52 = sbr.rel (0) target = $region17
    $region16: #{tpu_custom_call.1} parent=1 // pred_region
      %53 = dma.done [#allocation4], 256
    $region17: #{tpu_custom_call.1} parent=1 // pred_fallthru
      _
    %54 = vsyncpa [#allocation3], 1
    %55 = vsyncpa [#allocation4], 1

</llo_original>
